<compile_context>
chip_gen: v7x
topology: tpu7x:2x2x1
jax: 0.10.0
libtpu: 0.0.40
codegen_flags: <defaults>
</compile_context>

<pallas_src>
import functools

import jax
import jax.numpy as jnp
from jax import lax
from jax.experimental import pallas as pl
from jax.experimental.pallas import tpu as pltpu


def _cdiv(a, b):
    return -(-a // b)


def _round_up(x, mult):
    return _cdiv(x, mult) * mult


def _adsh_stats_kernel(b_ref, s_ref, sb_ref, bb_ref, s2_ref, *,
                       n, tn, inner, needs_mask):
    """Accumulates S@B (m,L), B.T@B (L,L) and row-sums of S^2 (m,1) over n-tiles."""
    c = pl.program_id(0)          # core-split index ("parallel")
    k = pl.program_id(1)          # n-tile index within this core ("arbitrary")

    @pl.when(k == 0)
    def _init():
        sb_ref[...] = jnp.zeros_like(sb_ref)
        bb_ref[...] = jnp.zeros_like(bb_ref)
        s2_ref[...] = jnp.zeros_like(s2_ref)

    s = s_ref[...]                # (m, tn) at stored dtype
    b = b_ref[...]                # (tn, L) at stored dtype
    # Feed the MXU at the stored floating dtype; integer-stored (+-1) codes are
    # upcast to bf16 on the VPU (lossless for +-1/0 values).
    if not jnp.issubdtype(s.dtype, jnp.floating):
        s = s.astype(jnp.bfloat16)
    if not jnp.issubdtype(b.dtype, jnp.floating):
        b = b.astype(jnp.bfloat16)
    cdt = jnp.promote_types(s.dtype, b.dtype)
    s = s.astype(cdt)
    b = b.astype(cdt)

    def accumulate(s_v, b_v):
        # S_tile @ B_tile : contract over the tn axis (MXU, K = tn).
        sb_ref[...] += lax.dot_general(
            s_v, b_v, (((1,), (0,)), ((), ())),
            preferred_element_type=jnp.float32)
        # B_tile.T @ B_tile : contract over the tn axis (MXU, K = tn).
        bb_ref[...] += lax.dot_general(
            b_v, b_v, (((0,), (0,)), ((), ())),
            preferred_element_type=jnp.float32)
        # sum(S^2) partials per row; the cheap cross-row reduce is in the wrapper.
        s_f32 = s_v.astype(jnp.float32)
        s2_ref[...] += jnp.sum(s_f32 * s_f32, axis=1, keepdims=True)

    if not needs_mask:
        accumulate(s, b)
    else:
        g = c * inner + k                    # logical n-tile index
        start = g * tn
        is_full = start + tn <= n            # tile lies entirely inside [0, n)

        @pl.when(is_full)
        def _fast():
            accumulate(s, b)

        @pl.when(jnp.logical_not(is_full))
        def _ragged():
            # Ragged (or fully out-of-range, clamped) tile: zero the invalid
            # columns of S and rows of B so they contribute exactly 0.
            col = lax.broadcasted_iota(jnp.int32, s.shape, 1) + start
            row = lax.broadcasted_iota(jnp.int32, b.shape, 0) + start
            s_m = jnp.where(col < n, s, jnp.zeros((), s.dtype))
            b_m = jnp.where(row < n, b, jnp.zeros((), b.dtype))
            accumulate(s_m, b_m)


def _pick_tile(m, L, n, s_itemsize, b_itemsize, budget_bytes=40 << 20):
    """Largest n-tile whose double-buffered streamed footprint fits the budget."""
    if n <= 128:
        return n                              # one full-width tile, no masking
    for tn in (1024, 512, 256, 128):
        streamed = 2 * (m * tn * s_itemsize + tn * L * b_itemsize)
        if streamed <= budget_bytes:
            return min(tn, _round_up(n, 128))
    return 128


def adsh_loss(F, B, S, omega, *, code_length, gamma):
    """ADSH loss.  The heavy O(m*n*L) statistics run in a Pallas TPU kernel."""
    F = jnp.asarray(F, jnp.float32)
    m, L = F.shape
    n = B.shape[0]
    assert B.shape == (n, L) and S.shape == (m, n)

    s_bytes = jnp.dtype(S.dtype).itemsize
    b_bytes = jnp.dtype(B.dtype).itemsize
    tn = _pick_tile(m, L, n, s_bytes, b_bytes)

    n_tiles = _cdiv(n, tn)
    ncores = 2 if n_tiles >= 2 else 1         # leading "parallel" axis (v7x megacore)
    inner = _cdiv(n_tiles, ncores)
    needs_mask = (ncores * inner * tn) != n
    max_tile = n_tiles - 1

    # Clamp logical tile indices so no DMA starts past the array; clamped
    # duplicate tiles are fully masked in-kernel and contribute 0.
    def b_map(c, k):
        return (jnp.minimum(c * inner + k, max_tile), 0)

    def s_map(c, k):
        return (0, jnp.minimum(c * inner + k, max_tile))

    streamed = 2 * (m * tn * s_bytes + tn * L * b_bytes)
    partials = 2 * 4 * (m * L + L * L + m)
    vmem_limit = int(min(max(streamed + partials + (8 << 20), 32 << 20), 48 << 20))

    kernel = functools.partial(
        _adsh_stats_kernel, n=n, tn=tn, inner=inner, needs_mask=needs_mask)

    sb_p, bb_p, s2_p = pl.pallas_call(
        kernel,
        out_shape=(jax.ShapeDtypeStruct((ncores, m, L), jnp.float32),
                   jax.ShapeDtypeStruct((ncores, L, L), jnp.float32),
                   jax.ShapeDtypeStruct((ncores, m, 1), jnp.float32)),
        grid_spec=pltpu.PrefetchScalarGridSpec(
            num_scalar_prefetch=0,
            grid=(ncores, inner),
            in_specs=[
                # TODO(synk): on v7x consider pipeline_mode=pl.Buffered(3) for S.
                pl.BlockSpec((tn, L), b_map),      # B: streamed n-tiles
                pl.BlockSpec((m, tn), s_map),      # S: streamed n-tiles
            ],
            out_specs=(
                pl.BlockSpec((None, m, L), lambda c, k: (c, 0, 0)),  # S@B partials
                pl.BlockSpec((None, L, L), lambda c, k: (c, 0, 0)),  # B'B partials
                pl.BlockSpec((None, m, 1), lambda c, k: (c, 0, 0)),  # sum(S^2) rows
            ),
        ),
        compiler_params=pltpu.CompilerParams(
            dimension_semantics=("parallel", "arbitrary"),
            vmem_limit_bytes=vmem_limit,
        ),
    )(B, S)

    # O(m*L + L^2) finalization in plain JAX (tiny vs the streamed O(m*n*L)):
    #   sum((L*S - F@B.T)^2) = L^2*sum(S^2) - 2L*<F, S@B> + <F'F, B'B>.
    sb = jnp.sum(sb_p, axis=0)                 # S @ B     (m, L)
    bb = jnp.sum(bb_p, axis=0)                 # B.T @ B   (L, L)
    s2 = jnp.sum(s2_p)                         # sum(S^2)  scalar

    Lf = float(code_length)
    ftf = jnp.dot(F.T, F, precision=lax.Precision.HIGHEST)     # (L, L), tiny
    hash_raw = (Lf * Lf) * s2 - 2.0 * Lf * jnp.sum(F * sb) + jnp.sum(ftf * bb)

    # Quantization term: data-dependent row gather + O(m*L) -- plain JAX glue.
    b_omega = jnp.take(B, omega, axis=0).astype(jnp.float32)
    quant_raw = jnp.sum((F - b_omega) ** 2)

    scale = 12.0 / (float(m) * float(n) * float(code_length))  # python double
    hash_loss = hash_raw * jnp.float32(scale)
    quant_loss = quant_raw * jnp.float32(float(gamma) * scale)
    return hash_loss, quant_loss


def adsh_loss_ref(F, B, S, omega, *, code_length, gamma):
    """Plain-JAX reference matching the PyTorch module."""
    m, n = F.shape[0], B.shape[0]
    fb = jnp.dot(F, B.T, precision=lax.Precision.HIGHEST)
    hash_loss = jnp.sum((code_length * S - fb) ** 2) / (m * n) / code_length * 12
    quant_loss = jnp.sum((F - B[omega, :]) ** 2) / (m * n) * gamma / code_length * 12
    return hash_loss, quant_loss


if __name__ == "__main__":
    def make_case(key, m, n, L):
        k1, k2, k3, k4 = jax.random.split(key, 4)
        F = jnp.tanh(jax.random.normal(k1, (m, L), dtype=jnp.float32))
        B = jnp.where(jax.random.normal(k2, (n, L)) >= 0.0, 1.0, -1.0).astype(jnp.float32)
        S = jnp.where(jax.random.bernoulli(k3, 0.5, (m, n)), 1.0, -1.0).astype(jnp.float32)
        omega = jax.random.randint(k4, (m,), 0, n, dtype=jnp.int32)
        return F, B, S, omega

    cases = [(8, 16, 32),       # batch=8, database=16, code_length=32 (single ragged tile)
             (16, 2500, 64)]    # multi-tile + ragged last tile + 2-way core split
    keys = jax.random.split(jax.random.PRNGKey(0), len(cases))
    for ckey, (m, n, L) in zip(keys, cases):
        F, B, S, omega = make_case(ckey, m, n, L)
        hash_loss, quant_loss = adsh_loss(F, B, S, omega, code_length=L, gamma=200.0)
        jax.block_until_ready((hash_loss, quant_loss))
        ref_h, ref_q = adsh_loss_ref(F, B, S, omega, code_length=L, gamma=200.0)
        assert jnp.allclose(hash_loss, ref_h, rtol=1e-4, atol=1e-3), (m, n, L, hash_loss, ref_h)
        assert jnp.allclose(quant_loss, ref_q, rtol=1e-4, atol=1e-3), (m, n, L, quant_loss, ref_q)

    print("KERNEL_OK")
</pallas_src>

<mosaic_0001>
module attributes {stable_mosaic.version = 11 : i64} {
  func.func @_adsh_stats_kernel(%arg0: i32, %arg1: i32, %arg2: memref<16x32xf32, #tpu.memory_space<vmem>>, %arg3: memref<8x16xf32, #tpu.memory_space<vmem>>, %arg4: memref<1x8x32xf32, #tpu.memory_space<vmem>>, %arg5: memref<1x32x32xf32, #tpu.memory_space<vmem>>, %arg6: memref<1x8x1xf32, #tpu.memory_space<vmem>>) attributes {dimension_semantics = [#tpu.dimension_semantics<parallel>, #tpu.dimension_semantics<arbitrary>], iteration_bounds = array<i64: 1, 1>, scalar_prefetch = 0 : i64, scratch_operands = 0 : i64, tpu.core_type = #tpu.core_type<tc>, window_params = [{transform_indices = @transform_0, window_bounds = array<i64: 16, 32>}, {transform_indices = @transform_1, window_bounds = array<i64: 8, 16>}, {transform_indices = @transform_2, window_bounds = array<i64: 1, 8, 32>}, {transform_indices = @transform_3, window_bounds = array<i64: 1, 32, 32>}, {transform_indices = @transform_4, window_bounds = array<i64: 1, 8, 1>}]} {
    %c0_i32 = arith.constant 0 : i32
    %0 = arith.cmpi eq, %arg1, %c0_i32 : i32
    %1 = arith.extui %0 : i1 to i32
    %c0_i32_0 = arith.constant 0 : i32
    %2 = arith.cmpi ne, %1, %c0_i32_0 : i32
    scf.if %2 {
      %cst_24 = arith.constant 0.000000e+00 : f32
      %28 = vector.broadcast %cst_24 : f32 to vector<8x32xf32>
      %c0_25 = arith.constant 0 : index
      %c0_26 = arith.constant 0 : index
      %c0_27 = arith.constant 0 : index
      %29 = vector.load %arg4[%c0_25, %c0_26, %c0_27] : memref<1x8x32xf32, #tpu.memory_space<vmem>>, vector<1x8x32xf32>
      %30 = vector.shape_cast %29 : vector<1x8x32xf32> to vector<8x32xf32>
      %31 = vector.shape_cast %28 : vector<8x32xf32> to vector<1x8x32xf32>
      tpu.vector_store %arg4[%c0_25, %c0_26, %c0_27], %31 {strides = array<i32>} : memref<1x8x32xf32, #tpu.memory_space<vmem>>, vector<1x8x32xf32>,
      %cst_28 = arith.constant 0.000000e+00 : f32
      %32 = vector.broadcast %cst_28 : f32 to vector<32x32xf32>
      %c0_29 = arith.constant 0 : index
      %c0_30 = arith.constant 0 : index
      %c0_31 = arith.constant 0 : index
      %33 = vector.load %arg5[%c0_29, %c0_30, %c0_31] : memref<1x32x32xf32, #tpu.memory_space<vmem>>, vector<1x32x32xf32>
      %34 = vector.shape_cast %33 : vector<1x32x32xf32> to vector<32x32xf32>
      %35 = vector.shape_cast %32 : vector<32x32xf32> to vector<1x32x32xf32>
      tpu.vector_store %arg5[%c0_29, %c0_30, %c0_31], %35 {strides = array<i32>} : memref<1x32x32xf32, #tpu.memory_space<vmem>>, vector<1x32x32xf32>,
      %cst_32 = arith.constant 0.000000e+00 : f32
      %36 = vector.broadcast %cst_32 : f32 to vector<8x1xf32>
      %c0_33 = arith.constant 0 : index
      %c0_34 = arith.constant 0 : index
      %c0_35 = arith.constant 0 : index
      %37 = vector.load %arg6[%c0_33, %c0_34, %c0_35] : memref<1x8x1xf32, #tpu.memory_space<vmem>>, vector<1x8x1xf32>
      %38 = vector.shape_cast %37 : vector<1x8x1xf32> to vector<8x1xf32>
      %39 = vector.shape_cast %36 : vector<8x1xf32> to vector<1x8x1xf32>
      tpu.vector_store %arg6[%c0_33, %c0_34, %c0_35], %39 {strides = array<i32>} : memref<1x8x1xf32, #tpu.memory_space<vmem>>, vector<1x8x1xf32>,
    } else {
    }
    %c0 = arith.constant 0 : index
    %c0_1 = arith.constant 0 : index
    %3 = vector.load %arg3[%c0, %c0_1] : memref<8x16xf32, #tpu.memory_space<vmem>>, vector<8x16xf32>
    %c0_2 = arith.constant 0 : index
    %c0_3 = arith.constant 0 : index
    %4 = vector.load %arg2[%c0_2, %c0_3] : memref<16x32xf32, #tpu.memory_space<vmem>>, vector<16x32xf32>
    %c0_4 = arith.constant 0 : index
    %c0_5 = arith.constant 0 : index
    %c0_6 = arith.constant 0 : index
    %5 = vector.load %arg4[%c0_4, %c0_5, %c0_6] : memref<1x8x32xf32, #tpu.memory_space<vmem>>, vector<1x8x32xf32>
    %6 = vector.shape_cast %5 : vector<1x8x32xf32> to vector<8x32xf32>
    %cst = arith.constant dense<0.000000e+00> : vector<8x32xf32>
    %7 = tpu.matmul %3, %4, %cst {dimension_numbers = #tpu.dot_dimension_numbers<[1], [0], [0], [1], [0, 0, 1, 1], [], []>} : vector<8x16xf32>, vector<16x32xf32>, vector<8x32xf32> -> vector<8x32xf32>
    %8 = arith.addf %6, %7 : vector<8x32xf32>
    %c0_7 = arith.constant 0 : index
    %c0_8 = arith.constant 0 : index
    %c0_9 = arith.constant 0 : index
    %9 = vector.load %arg4[%c0_7, %c0_8, %c0_9] : memref<1x8x32xf32, #tpu.memory_space<vmem>>, vector<1x8x32xf32>
    %10 = vector.shape_cast %9 : vector<1x8x32xf32> to vector<8x32xf32>
    %11 = vector.shape_cast %8 : vector<8x32xf32> to vector<1x8x32xf32>
    tpu.vector_store %arg4[%c0_7, %c0_8, %c0_9], %11 {strides = array<i32>} : memref<1x8x32xf32, #tpu.memory_space<vmem>>, vector<1x8x32xf32>,
    %c0_10 = arith.constant 0 : index
    %c0_11 = arith.constant 0 : index
    %c0_12 = arith.constant 0 : index
    %12 = vector.load %arg5[%c0_10, %c0_11, %c0_12] : memref<1x32x32xf32, #tpu.memory_space<vmem>>, vector<1x32x32xf32>
    %13 = vector.shape_cast %12 : vector<1x32x32xf32> to vector<32x32xf32>
    %cst_13 = arith.constant dense<0.000000e+00> : vector<32x32xf32>
    %14 = tpu.matmul %4, %4, %cst_13 {dimension_numbers = #tpu.dot_dimension_numbers<[0], [0], [1], [1], [0, 1, 1, 1], [], []>} : vector<16x32xf32>, vector<16x32xf32>, vector<32x32xf32> -> vector<32x32xf32>
    %15 = arith.addf %13, %14 : vector<32x32xf32>
    %c0_14 = arith.constant 0 : index
    %c0_15 = arith.constant 0 : index
    %c0_16 = arith.constant 0 : index
    %16 = vector.load %arg5[%c0_14, %c0_15, %c0_16] : memref<1x32x32xf32, #tpu.memory_space<vmem>>, vector<1x32x32xf32>
    %17 = vector.shape_cast %16 : vector<1x32x32xf32> to vector<32x32xf32>
    %18 = vector.shape_cast %15 : vector<32x32xf32> to vector<1x32x32xf32>
    tpu.vector_store %arg5[%c0_14, %c0_15, %c0_16], %18 {strides = array<i32>} : memref<1x32x32xf32, #tpu.memory_space<vmem>>, vector<1x32x32xf32>,
    %c0_17 = arith.constant 0 : index
    %c0_18 = arith.constant 0 : index
    %c0_19 = arith.constant 0 : index
    %19 = vector.load %arg6[%c0_17, %c0_18, %c0_19] : memref<1x8x1xf32, #tpu.memory_space<vmem>>, vector<1x8x1xf32>
    %20 = vector.shape_cast %19 : vector<1x8x1xf32> to vector<8x1xf32>
    %21 = arith.mulf %3, %3 : vector<8x16xf32>
    %cst_20 = arith.constant dense<0.000000e+00> : vector<8xf32>
    %22 = vector.multi_reduction <add>, %21, %cst_20 [1] : vector<8x16xf32> to vector<8xf32>
    %23 = vector.shape_cast %22 : vector<8xf32> to vector<8x1xf32>
    %24 = arith.addf %20, %23 : vector<8x1xf32>
    %c0_21 = arith.constant 0 : index
    %c0_22 = arith.constant 0 : index
    %c0_23 = arith.constant 0 : index
    %25 = vector.load %arg6[%c0_21, %c0_22, %c0_23] : memref<1x8x1xf32, #tpu.memory_space<vmem>>, vector<1x8x1xf32>
    %26 = vector.shape_cast %25 : vector<1x8x1xf32> to vector<8x1xf32>
    %27 = vector.shape_cast %24 : vector<8x1xf32> to vector<1x8x1xf32>
    tpu.vector_store %arg6[%c0_21, %c0_22, %c0_23], %27 {strides = array<i32>} : memref<1x8x1xf32, #tpu.memory_space<vmem>>, vector<1x8x1xf32>,
    return
  }
  func.func @transform_0(%arg0: i32, %arg1: i32) -> (i32, i32) {
    %c1_i32 = arith.constant 1 : i32
    %0 = arith.muli %arg0, %c1_i32 : i32
    %1 = arith.addi %0, %arg1 : i32
    %c0_i32 = arith.constant 0 : i32
    %2 = arith.minsi %1, %c0_i32 : i32
    %c0_i32_0 = arith.constant 0 : i32
    %c0_i32_1 = arith.constant 0 : i32
    return %2, %c0_i32_0 : i32, i32
  }
  func.func @transform_1(%arg0: i32, %arg1: i32) -> (i32, i32) {
    %c1_i32 = arith.constant 1 : i32
    %0 = arith.muli %arg0, %c1_i32 : i32
    %1 = arith.addi %0, %arg1 : i32
    %c0_i32 = arith.constant 0 : i32
    %2 = arith.minsi %1, %c0_i32 : i32
    %c0_i32_0 = arith.constant 0 : i32
    %c0_i32_1 = arith.constant 0 : i32
    return %c0_i32_0, %2 : i32, i32
  }
  func.func @transform_2(%arg0: i32, %arg1: i32) -> (i32, i32, i32) {
    %c0_i32 = arith.constant 0 : i32
    %c0_i32_0 = arith.constant 0 : i32
    %c0_i32_1 = arith.constant 0 : i32
    return %arg0, %c0_i32, %c0_i32_0 : i32, i32, i32
  }
  func.func @transform_3(%arg0: i32, %arg1: i32) -> (i32, i32, i32) {
    %c0_i32 = arith.constant 0 : i32
    %c0_i32_0 = arith.constant 0 : i32
    %c0_i32_1 = arith.constant 0 : i32
    return %arg0, %c0_i32, %c0_i32_0 : i32, i32, i32
  }
  func.func @transform_4(%arg0: i32, %arg1: i32) -> (i32, i32, i32) {
    %c0_i32 = arith.constant 0 : i32
    %c0_i32_0 = arith.constant 0 : i32
    %c0_i32_1 = arith.constant 0 : i32
    return %arg0, %c0_i32, %c0_i32_0 : i32, i32, i32
  }
}

</mosaic_0001>

<llo_original>
// kernel: tpu_custom_call.1
$region0: #{tpu_custom_call.1}
  #allocation0 [shape = 'u32[]', space=smem, size = 0x4, offset = 0x4, fixed_abs, tag = 'smem constant byte address 0x4 - core index']
  #allocation1 [shape = 'u32[144,128]{1,0:T(1,128)}', space=vmem, size = 0x12000, scoped, tag = 'internal scratch']
  %s0 = inlined_call_operand.hbm [shape: f32[16,32], index: 0, kind: input, shape index: {}]
  %s1 = inlined_call_operand.hbm [shape: f32[8,16], index: 1, kind: input, shape index: {}]
  %s2 = inlined_call_operand.hbm [shape: f32[1,8,32], index: 2, kind: output, shape index: {0}]
  %s3 = inlined_call_operand.hbm [shape: f32[1,32,32], index: 3, kind: output, shape index: {1}]
  %s4 = inlined_call_operand.vmem [shape: f32[1,8,1], index: 4, kind: output, shape index: {2}]
  %5 = xla_tuple %s2, %s3, %s4
  %s6 = sld [smem:[#allocation0]]
  $region46: #{tpu_custom_call.1} parent=0
    _
  %s8 = ssub.s32 1, %s6
  %s9 = scalar_select 0, %s8, %s6
  $region1: #{tpu_custom_call.1} parent=0
    #allocation2 [shape = 'u8[8192]{0}', space=vmem, size = 0x2000, scoped, tag = 'input window, operand 0, single buffered']
    #allocation3 [shape = 's32[1]{0}', space=sflag, size = 0x4, scoped, tag = 'scoped memory for tpu_custom_call.1']
    #allocation4 [shape = 's32[1]{0}', space=sflag, size = 0x4, scoped, tag = 'scoped memory for tpu_custom_call.1']
    #allocation5 [shape = 'u8[4096]{0}', space=vmem, size = 0x1000, scoped, tag = 'input window, operand 1, single buffered']
    #allocation6 [shape = 's32[1]{0}', space=sflag, size = 0x4, scoped, tag = 'scoped memory for tpu_custom_call.1']
    #allocation7 [shape = 'u8[4096]{0}', space=vmem, size = 0x1000, scoped, tag = 'output window, operand 0, single buffered']
    #allocation8 [shape = 'u8[16384]{0}', space=vmem, size = 0x4000, scoped, tag = 'output window, operand 1, single buffered']
    #allocation9 [shape = 's32[1]{0}', space=sflag, size = 0x4, scoped, tag = 'scoped memory for tpu_custom_call.1']
    %10 = vsyncpa [#allocation3], 0
    %11 = vsyncpa [#allocation6], 0
    %12 = vsyncpa [#allocation4], 0
    %13 = vsyncpa [#allocation9], 0
    // Predicated region
    $region2: #{tpu_custom_call.1} parent=1 // pred_check
      _
    $region3: #{tpu_custom_call.1} parent=1 // pred_check_branch
      %15 = sbr.rel (0) target = $region5
    $region4: #{tpu_custom_call.1} parent=1 // pred_region
      %s16 = sadd.s32 0, 0
      %p17 = scmp.lt.s32.totalorder %s16, 0
      %s18 = scalar_select %p17, %s16, 0
      %s19 = smul.u32 2, %s18
      %s21 = ssub.s32 256, 256
      %22 = vsyncadd [#allocation3], %s21
      %s23 = smul.addr %s19, 128
      %s24 = scalar_lea.hbm %s0, %s23
      %s25 = sshll.u32 [#allocation2], 4
      %s26 = int_to_ptr.vmem [resolvable:$true] %s25
      %31 = dma.hbm_to_vmem [thread:$0]  %s24, 256, %s26, [#allocation3], 128, 128, 8
    $region5: #{tpu_custom_call.1} parent=1 // pred_fallthru
      _
    // Predicated region
    $region6: #{tpu_custom_call.1} parent=1 // pred_check
      _
    $region7: #{tpu_custom_call.1} parent=1 // pred_check_branch
      %33 = sbr.rel (0) target = $region9
    $region8: #{tpu_custom_call.1} parent=1 // pred_region
      %s34 = sadd.s32 0, 0
      %p35 = scmp.lt.s32.totalorder %s34, 0
      %s36 = scalar_select %p35, %s34, 0
      %s38 = ssub.s32 128, 128
      %39 = vsyncadd [#allocation6], %s38
      %s40 = smul.addr %s36, 128
      %s41 = scalar_lea.hbm %s1, %s40
      %s43 = sshll.u32 [#allocation5], 4
      %s44 = int_to_ptr.vmem [resolvable:$true] %s43
      %46 = dma.hbm_to_vmem [thread:$0]  %s41, 128, %s44, [#allocation6]
    $region9: #{tpu_custom_call.1} parent=1 // pred_fallthru
      _
    // Predicated region
    $region10: #{tpu_custom_call.1} parent=1 // pred_check
      _
    $region11: #{tpu_custom_call.1} parent=1 // pred_check_branch
      %48 = sbr.rel (0) target = $region13
    $region12: #{tpu_custom_call.1} parent=1 // pred_region
      %49 = dma.done [#allocation3], 256
    $region13: #{tpu_custom_call.1} parent=1 // pred_fallthru
      _
    // Predicated region
    $region14: #{tpu_custom_call.1} parent=1 // pred_check
      _
    $region15: #{tpu_custom_call.1} parent=1 // pred_check_branch
      %51 = sbr.rel (0) target = $region17
    $region16: #{tpu_custom_call.1} parent=1 // pred_region
      %52 = dma.done [#allocation6], 128
    $region17: #{tpu_custom_call.1} parent=1 // pred_fallthru
      _
    %s53 = sadd.s32 0, 0
    %p54 = scmp.lt.s32.totalorder %s53, 0
    %s55 = scalar_select %p54, %s53, 0
    %s56 = smul.u32 2, %s55
    %s57 = sadd.s32 0, 0
    %p58 = scmp.lt.s32.totalorder %s57, 0
    %s59 = scalar_select %p58, %s57, 0
    %p60 = scmp.eq.s32.totalorder 0, 0
    // Predicated region
    $region18: #{tpu_custom_call.1} parent=1 // pred_check
      %p61 = pneg %p60
    $region19: #{tpu_custom_call.1} parent=1 // pred_check_branch
      %63 = sbr.rel (%p61) target = $region21
    $region20: #{tpu_custom_call.1} parent=1 // pred_region
      %vm64 = vcmask 261120
      %65 = vst.msk [vmem:[#allocation7] sm:$0xff] %vm64, 0.0
      %66 = vst.msk [vmem:[#allocation8] sm:$0xff] %vm64, 0.0
      %67 = vst.msk [vmem:[#allocation8 + $0x8] sm:$0xff] %vm64, 0.0
      %68 = vst.msk [vmem:[#allocation8 + $0x10] sm:$0xff] %vm64, 0.0
      %69 = vst.msk [vmem:[#allocation8 + $0x18] sm:$0xff] %vm64, 0.0
      %vm70 = vcmask 7168
      %71 = vst.msk [vmem:[%s4] sm:$0xff] %vm70, 0.0
    $region21: #{tpu_custom_call.1} parent=1 // pred_fallthru
      _
    %v72 = vld [vmem:[#allocation5] sm:$0xff]
    %v73 = vld [vmem:[#allocation2] sm:$0xff]
    %v74 = vld [vmem:[#allocation2 + $0x8] sm:$0xff]
    %v75 = vld [vmem:[#allocation7] sm:$0xff]
    %vm76 = vcmask 130048
    %v78 = vsel %vm76, %v72, 0
    %80 = vmatprep.subr.mxu0 0.0
    %81 = vmatpush1.msra.mxu0 %v73
    %82 = vmatprep.subr.mxu0 0.0
    %83 = vmatpush1.msra.mxu0 %v74
    %84 = vmatprep.subr.mxu0 0.0
    %85 = vmatpush1.msra.mxu0 0.0
    %86 = vmatprep.subr.mxu0 0.0
    %87 = vmatpush1.msra.mxu0 0.0
    %88 = vmatprep.subr.mxu0 0.0
    %89 = vmatpush1.msra.mxu0 0.0
    %90 = vmatprep.subr.mxu0 0.0
    %91 = vmatpush1.msra.mxu0 0.0
    %92 = vmatprep.subr.mxu0 0.0
    %93 = vmatpush1.msra.mxu0 0.0
    %94 = vmatprep.subr.mxu0 0.0
    %95 = vmatpush1.msra.mxu0 0.0
    %96 = vmatprep.subr.mxu0 0.0
    %97 = vmatpush1.msra.mxu0 0.0
    %98 = vmatprep.subr.mxu0 0.0
    %99 = vmatpush1.msra.mxu0 0.0
    %100 = vmatprep.subr.mxu0 0.0
    %101 = vmatpush1.msra.mxu0 0.0
    %102 = vmatprep.subr.mxu0 0.0
    %103 = vmatpush1.msra.mxu0 0.0
    %104 = vmatprep.subr.mxu0 0.0
    %105 = vmatpush1.msra.mxu0 0.0
    %106 = vmatprep.subr.mxu0 0.0
    %107 = vmatpush1.msra.mxu0 0.0
    %108 = vmatprep.subr.mxu0 0.0
    %109 = vmatpush1.msra.mxu0 0.0
    %110 = vmatprep.subr.mxu0 0.0
    %111 = vmatpush1.msra.mxu0 0.0
    %112 = vmatprep.subr.mxu0 0.0
    %113 = vmatpush1.msra.mxu0 0.0
    %114 = vmatprep.subr.mxu0 0.0
    %115 = vmatpush1.msra.mxu0 0.0
    %116 = vmatprep.subr.mxu0 0.0
    %117 = vmatpush1.msra.mxu0 0.0
    %118 = vmatprep.subr.mxu0 0.0
    %119 = vmatpush1.msra.mxu0 0.0
    %120 = vmatprep.subr.mxu0 0.0
    %121 = vmatpush1.msra.mxu0 0.0
    %122 = vmatprep.subr.mxu0 0.0
    %123 = vmatpush1.msra.mxu0 0.0
    %124 = vmatprep.subr.mxu0 0.0
    %125 = vmatpush1.msra.mxu0 0.0
    %126 = vmatprep.subr.mxu0 0.0
    %127 = vmatpush1.msra.mxu0 0.0
    %128 = vmatprep.subr.mxu0 0.0
    %129 = vmatpush1.msra.mxu0 0.0
    %130 = vmatprep.subr.mxu0 0.0
    %131 = vmatpush1.msra.mxu0 0.0
    %132 = vmatprep.subr.mxu0 0.0
    %133 = vmatpush1.msra.mxu0 0.0
    %134 = vmatprep.subr.mxu0 0.0
    %135 = vmatpush1.msra.mxu0 0.0
    %136 = vmatprep.subr.mxu0 0.0
    %137 = vmatpush1.msra.mxu0 0.0
    %138 = vmatprep.subr.mxu0 0.0
    %139 = vmatpush1.msra.mxu0 0.0
    %140 = vmatprep.subr.mxu0 0.0
    %141 = vmatpush1.msra.mxu0 0.0
    %142 = vmatprep.subr.mxu0 0.0
    %143 = vmatpush1.msra.mxu0 0.0
    %144 = vmatprep.mubr.f32.mxu0 0.0
    %145 = vmatmul.mubr.f32.gmra.mrb[0].mxu0 %v78
    %v146 = vpop.f32.mrb[0].mxu0
    %v147 = vadd.f32 0.0, %v146
    %v148 = vpop.f32.mrb[0].mxu0
    %149 = vdwg.mxu0
    %v150 = vadd.f32 %v75, %v147
    %vm151 = vcmask 261120
    %152 = vst.msk [vmem:[#allocation7] sm:$0xff] %vm151, %v150
    %v153 = vld [vmem:[#allocation8] sm:$0xff]
    %v154 = vld [vmem:[#allocation8 + $0x8] sm:$0xff]
    %v155 = vld [vmem:[#allocation8 + $0x10] sm:$0xff]
    %v156 = vld [vmem:[#allocation8 + $0x18] sm:$0xff]
    %157 = vxpose.xlu0.b32.start [1/16] %v73, 128
    %158 = vxpose.xlu0.b32.cont [2/16] %v74, 128
    %159 = vxpose.xlu0.b32.cont [3/16] 0.0, 128
    %160 = vxpose.xlu0.b32.cont [4/16] 0.0, 128
    %161 = vxpose.xlu0.b32.cont [5/16] 0.0, 128
    %162 = vxpose.xlu0.b32.cont [6/16] 0.0, 128
    %163 = vxpose.xlu0.b32.cont [7/16] 0.0, 128
    %164 = vxpose.xlu0.b32.cont [8/16] 0.0, 128
    %165 = vxpose.xlu0.b32.cont [9/16] 0.0, 128
    %166 = vxpose.xlu0.b32.cont [10/16] 0.0, 128
    %167 = vxpose.xlu0.b32.cont [11/16] 0.0, 128
    %168 = vxpose.xlu0.b32.cont [12/16] 0.0, 128
    %169 = vxpose.xlu0.b32.cont [13/16] 0.0, 128
    %170 = vxpose.xlu0.b32.cont [14/16] 0.0, 128
    %171 = vxpose.xlu0.b32.cont [15/16] 0.0, 128
    %172 = vxpose.xlu0.b32.end [16/16] 0.0, 128
    %v173 = vpop.trf.xlu0
    %v174 = vpop.trf.xlu0
    %v175 = vpop.trf.xlu0
    %v176 = vpop.trf.xlu0
    %v177 = vpop.trf.xlu0
    %v178 = vpop.trf.xlu0
    %v179 = vpop.trf.xlu0
    %v180 = vpop.trf.xlu0
    %v181 = vpop.trf.xlu0
    %v182 = vpop.trf.xlu0
    %v183 = vpop.trf.xlu0
    %v184 = vpop.trf.xlu0
    %v185 = vpop.trf.xlu0
    %v186 = vpop.trf.xlu0
    %v187 = vpop.trf.xlu0
    %v188 = vpop.trf.xlu0
    %v190 = vsel %vm76, %v173, 0
    %v193 = vsel %vm76, %v174, 0
    %v196 = vsel %vm76, %v175, 0
    %v199 = vsel %vm76, %v176, 0
    %201 = vmatprep.subr.mxu0 0.0
    %202 = vmatpush1.msra.mxu0 %v73
    %203 = vmatprep.subr.mxu0 0.0
    %204 = vmatpush1.msra.mxu0 %v74
    %205 = vmatprep.subr.mxu0 0.0
    %206 = vmatpush1.msra.mxu0 0.0
    %207 = vmatprep.subr.mxu0 0.0
    %208 = vmatpush1.msra.mxu0 0.0
    %209 = vmatprep.subr.mxu0 0.0
    %210 = vmatpush1.msra.mxu0 0.0
    %211 = vmatprep.subr.mxu0 0.0
    %212 = vmatpush1.msra.mxu0 0.0
    %213 = vmatprep.subr.mxu0 0.0
    %214 = vmatpush1.msra.mxu0 0.0
    %215 = vmatprep.subr.mxu0 0.0
    %216 = vmatpush1.msra.mxu0 0.0
    %217 = vmatprep.subr.mxu0 0.0
    %218 = vmatpush1.msra.mxu0 0.0
    %219 = vmatprep.subr.mxu0 0.0
    %220 = vmatpush1.msra.mxu0 0.0
    %221 = vmatprep.subr.mxu0 0.0
    %222 = vmatpush1.msra.mxu0 0.0
    %223 = vmatprep.subr.mxu0 0.0
    %224 = vmatpush1.msra.mxu0 0.0
    %225 = vmatprep.subr.mxu0 0.0
    %226 = vmatpush1.msra.mxu0 0.0
    %227 = vmatprep.subr.mxu0 0.0
    %228 = vmatpush1.msra.mxu0 0.0
    %229 = vmatprep.subr.mxu0 0.0
    %230 = vmatpush1.msra.mxu0 0.0
    %231 = vmatprep.subr.mxu0 0.0
    %232 = vmatpush1.msra.mxu0 0.0
    %233 = vmatprep.subr.mxu0 0.0
    %234 = vmatpush1.msra.mxu0 0.0
    %235 = vmatprep.subr.mxu0 0.0
    %236 = vmatpush1.msra.mxu0 0.0
    %237 = vmatprep.subr.mxu0 0.0
    %238 = vmatpush1.msra.mxu0 0.0
    %239 = vmatprep.subr.mxu0 0.0
    %240 = vmatpush1.msra.mxu0 0.0
    %241 = vmatprep.subr.mxu0 0.0
    %242 = vmatpush1.msra.mxu0 0.0
    %243 = vmatprep.subr.mxu0 0.0
    %244 = vmatpush1.msra.mxu0 0.0
    %245 = vmatprep.subr.mxu0 0.0
    %246 = vmatpush1.msra.mxu0 0.0
    %247 = vmatprep.subr.mxu0 0.0
    %248 = vmatpush1.msra.mxu0 0.0
    %249 = vmatprep.subr.mxu0 0.0
    %250 = vmatpush1.msra.mxu0 0.0
    %251 = vmatprep.subr.mxu0 0.0
    %252 = vmatpush1.msra.mxu0 0.0
    %253 = vmatprep.subr.mxu0 0.0
    %254 = vmatpush1.msra.mxu0 0.0
    %255 = vmatprep.subr.mxu0 0.0
    %256 = vmatpush1.msra.mxu0 0.0
    %257 = vmatprep.subr.mxu0 0.0
    %258 = vmatpush1.msra.mxu0 0.0
    %259 = vmatprep.subr.mxu0 0.0
    %260 = vmatpush1.msra.mxu0 0.0
    %261 = vmatprep.subr.mxu0 0.0
    %262 = vmatpush1.msra.mxu0 0.0
    %263 = vmatprep.subr.mxu0 0.0
    %264 = vmatpush1.msra.mxu0 0.0
    %265 = vmatprep.mubr.f32.mxu0 0.0
    %266 = vmatmul.mubr.f32.gmra.mrb[0].mxu0 %v190
    %v267 = vpop.f32.mrb[0].mxu0
    %v268 = vadd.f32 0.0, %v267
    %v269 = vpop.f32.mrb[0].mxu0
    %270 = vmatprep.mubr.f32.mxu0 0.0
    %271 = vmatmul.mubr.f32.gmra.mrb[0].mxu0 %v193
    %v272 = vpop.f32.mrb[0].mxu0
    %v273 = vadd.f32 0.0, %v272
    %v274 = vpop.f32.mrb[0].mxu0
    %275 = vmatprep.mubr.f32.mxu0 0.0
    %276 = vmatmul.mubr.f32.gmra.mrb[0].mxu0 %v196
    %v277 = vpop.f32.mrb[0].mxu0
    %v278 = vadd.f32 0.0, %v277
    %v279 = vpop.f32.mrb[0].mxu0
    %280 = vmatprep.mubr.f32.mxu0 0.0
    %281 = vmatmul.mubr.f32.gmra.mrb[0].mxu0 %v199
    %v282 = vpop.f32.mrb[0].mxu0
    %v283 = vadd.f32 0.0, %v282
    %v284 = vpop.f32.mrb[0].mxu0
    %285 = vdwg.mxu0
    %v286 = vadd.f32 %v153, %v268
    %v287 = vadd.f32 %v154, %v273
    %v288 = vadd.f32 %v155, %v278
    %v289 = vadd.f32 %v156, %v283
    %290 = vst.msk [vmem:[#allocation8] sm:$0xff] %vm151, %v286
    %291 = vst.msk [vmem:[#allocation8 + $0x8] sm:$0xff] %vm151, %v287
    %292 = vst.msk [vmem:[#allocation8 + $0x10] sm:$0xff] %vm151, %v288
    %293 = vst.msk [vmem:[#allocation8 + $0x18] sm:$0xff] %vm151, %v289
    %v294 = vld [vmem:[%s4] sm:$0xff]
    %v295 = vmul.f32 %v72, %v72
    %v296 = vsel %vm76, %v295, 0.0
    %297 = vadd.xlane.f32.xlu0 %v296
    %v298 = vpop.xlane.xlu0 %297
    %v299 = vadd.f32 %v294, %v298
    %vm300 = vcmask 7168
    %301 = vst.msk [vmem:[%s4] sm:$0xff] %vm300, %v299
    // Predicated region
    $region22: #{tpu_custom_call.1} parent=1 // pred_check
      _
    $region23: #{tpu_custom_call.1} parent=1 // pred_check_branch
      %303 = sbr.rel (0) target = $region25
    $region24: #{tpu_custom_call.1} parent=1 // pred_region
      %s305 = ssub.s32 128, 128
      %306 = vsyncadd [#allocation4], %s305
      %s308 = sshll.u32 [#allocation7], 4
      %s309 = int_to_ptr.vmem [resolvable:$true] %s308
      %311 = dma.vmem_to_hbm [thread:$0]  %s309, 128, %s2, [#allocation4]
    $region25: #{tpu_custom_call.1} parent=1 // pred_fallthru
      _
    // Predicated region
    $region26: #{tpu_custom_call.1} parent=1 // pred_check
      _
    $region27: #{tpu_custom_call.1} parent=1 // pred_check_branch
      %313 = sbr.rel (0) target = $region29
    $region28: #{tpu_custom_call.1} parent=1 // pred_region
      %s315 = ssub.s32 512, 512
      %316 = vsyncadd [#allocation9], %s315
      %s317 = sshll.u32 [#allocation8], 4
      %s318 = int_to_ptr.vmem [resolvable:$true] %s317
      %323 = dma.vmem_to_hbm [thread:$0]  %s318, 512, %s3, [#allocation9], 128, 128, 8
    $region29: #{tpu_custom_call.1} parent=1 // pred_fallthru
      _
    // Predicated region
    $region30: #{tpu_custom_call.1} parent=1 // pred_check
      _
    $region31: #{tpu_custom_call.1} parent=1 // pred_check_branch
      %325 = sbr.rel (0) target = $region33
    $region32: #{tpu_custom_call.1} parent=1 // pred_region
      _
    $region33: #{tpu_custom_call.1} parent=1 // pred_fallthru
      _
    // Predicated region
    $region34: #{tpu_custom_call.1} parent=1 // pred_check
      _
    $region35: #{tpu_custom_call.1} parent=1 // pred_check_branch
      %327 = sbr.rel (0) target = $region37
    $region36: #{tpu_custom_call.1} parent=1 // pred_region
      %328 = dma.done [#allocation4], 128
    $region37: #{tpu_custom_call.1} parent=1 // pred_fallthru
      _
    // Predicated region
    $region38: #{tpu_custom_call.1} parent=1 // pred_check
      _
    $region39: #{tpu_custom_call.1} parent=1 // pred_check_branch
      %330 = sbr.rel (0) target = $region41
    $region40: #{tpu_custom_call.1} parent=1 // pred_region
      %331 = dma.done [#allocation9], 512
    $region41: #{tpu_custom_call.1} parent=1 // pred_fallthru
      _
    // Predicated region
    $region42: #{tpu_custom_call.1} parent=1 // pred_check
      _
    $region43: #{tpu_custom_call.1} parent=1 // pred_check_branch
      %333 = sbr.rel (0) target = $region45
    $region44: #{tpu_custom_call.1} parent=1 // pred_region
      _
    $region45: #{tpu_custom_call.1} parent=1 // pred_fallthru
      _
    %334 = vsyncpa [#allocation3], 1
    %335 = vsyncpa [#allocation6], 1
    %336 = vsyncpa [#allocation4], 1
    %337 = vsyncpa [#allocation9], 1

</llo_original>
